<compile_context>
chip_gen: v6e
topology: v6e:2x2x1
jax: 0.10.0
libtpu: 0.0.40
codegen_flags: <defaults>
</compile_context>

<pallas_src>
import math
import functools

import jax
import jax.numpy as jnp
from jax.experimental import pallas as pl
from jax.experimental.pallas import tpu as pltpu


_SQRT_2_OVER_PI = math.sqrt(2.0 / math.pi)
_GELU_C1 = _SQRT_2_OVER_PI * 0.044715


def _round_up(a, b):
    return ((a + b - 1) // b) * b


def _vmem_capacity_bytes():
    try:
        return int(pltpu.get_tpu_info().vmem_capacity_bytes)
    except Exception:
        return 64 * 1024 * 1024  # conservative default: v7x per-TC VMEM


def _ff_kernel(x_ref, w1h_ref, w1g_ref, w2_ref, o_ref,
               xn_sc, acc_sc, s1_sc, s2_sc, w2s_sc,
               *, inv_h, inv_i, eps):
    """One (token-tile, inter-tile) grid step.

    x_ref   : (tm, H)  activation tile (input dtype)
    w1h_ref : (H, ti)  W1 columns producing the GeGLU value half
    w1g_ref : (H, ti)  W1 columns producing the GeGLU gate half
    w2_ref  : (ti, H)  matching W2 rows
    o_ref   : (tm, H)  output tile (written on the last inter step)
    """
    k = pl.program_id(1)

    @pl.when(k == 0)
    def _init():
        x = x_ref[...].astype(jnp.float32)
        # LayerNorm #1 (no affine): one-pass sum / sum-of-squares, f32 stats.
        mu = jnp.sum(x, axis=-1, keepdims=True) * inv_h
        ex2 = jnp.sum(x * x, axis=-1, keepdims=True) * inv_h
        var = jnp.maximum(ex2 - mu * mu, 0.0)
        xn_sc[...] = ((x - mu) * jax.lax.rsqrt(var + eps)).astype(xn_sc.dtype)
        acc_sc[...] = jnp.zeros_like(acc_sc)
        s1_sc[...] = jnp.zeros_like(s1_sc)
        s2_sc[...] = jnp.zeros_like(s2_sc)
        w2s_sc[...] = jnp.zeros_like(w2s_sc)

    xn = xn_sc[...]                                          # bf16 MXU operand
    h = jnp.dot(xn, w1h_ref[...], preferred_element_type=jnp.float32)
    g = jnp.dot(xn, w1g_ref[...], preferred_element_type=jnp.float32)

    # GeGLU: h * gelu_tanh(g); tanh lands on the EUP slot.
    t = jnp.tanh(g * (_SQRT_2_OVER_PI + _GELU_C1 * (g * g)))
    z = (0.5 * h) * (g * (1.0 + t))

    # Accumulate LayerNorm-#2 statistics and the second matmul.
    s1_sc[...] += jnp.sum(z, axis=-1, keepdims=True)
    s2_sc[...] += jnp.sum(z * z, axis=-1, keepdims=True)
    w2 = w2_ref[...]
    w2s_sc[...] += jnp.sum(w2.astype(jnp.float32), axis=0, keepdims=True)
    acc_sc[...] += jnp.dot(z.astype(w2.dtype), w2,
                           preferred_element_type=jnp.float32)

    @pl.when(k == pl.num_programs(1) - 1)
    def _finalize():
        # LayerNorm #2 folded into the accumulated matmul:
        #   zn @ W2 = rsqrt(var_z + eps) * (z @ W2 - mean(z) * colsum(W2))
        mu = s1_sc[...] * inv_i
        var = jnp.maximum(s2_sc[...] * inv_i - mu * mu, 0.0)
        inv_std = jax.lax.rsqrt(var + eps)
        out = (acc_sc[...] - mu * w2s_sc[...]) * inv_std
        # Dropout is identity in eval mode.
        o_ref[...] = out.astype(o_ref.dtype)


@functools.cache
def _build_ff_call(M_pad, H, I, tm, ti, x_dtype, w_dtype, out_dtype, eps,
                   vmem_cap):
    kernel = functools.partial(_ff_kernel, inv_h=1.0 / H, inv_i=1.0 / I,
                               eps=eps)
    n_tok = M_pad // tm
    n_inter = I // ti

    xb = jnp.dtype(x_dtype).itemsize
    ob = jnp.dtype(out_dtype).itemsize
    wb = jnp.dtype(w_dtype).itemsize

    # Double-buffered x/weight tiles + out tile + scratch footprint.
    vmem_needed = (
        2 * tm * H * xb                       # x tile (pipelined)
        + 2 * tm * H * ob                     # output tile
        + 2 * (2 * H * ti + ti * H) * wb      # w1h / w1g / w2 tiles (pipelined)
        + tm * H * wb                         # xn scratch (bf16)
        + tm * H * 4                          # f32 accumulator
        + tm * 2 * 128 * 4                    # s1 / s2 (lane padded)
        + 8 * H * 4                           # colsum(W2) (sublane padded)
    )
    vmem_limit = int(min(0.9 * vmem_cap,
                         max(2 * vmem_needed, 32 * 1024 * 1024)))

    cost = pl.CostEstimate(
        flops=int(6 * M_pad * H * I),                 # 2*M*H*2I + 2*M*I*H
        transcendentals=int(M_pad * I),               # tanh per GeGLU element
        bytes_accessed=int(M_pad * H * (xb + ob)
                           + n_tok * 3 * H * I * wb),  # weights streamed per token tile
    )

    return pl.pallas_call(
        kernel,
        out_shape=jax.ShapeDtypeStruct((M_pad, H), out_dtype),
        grid_spec=pltpu.PrefetchScalarGridSpec(
            num_scalar_prefetch=0,
            grid=(n_tok, n_inter),
            in_specs=[
                pl.BlockSpec((tm, H), lambda i, k: (i, 0)),   # x (inter-invariant)
                pl.BlockSpec((H, ti), lambda i, k: (0, k)),   # W1 value columns
                pl.BlockSpec((H, ti), lambda i, k: (0, k)),   # W1 gate columns
                pl.BlockSpec((ti, H), lambda i, k: (k, 0)),   # W2 rows
            ],
            out_specs=pl.BlockSpec((tm, H), lambda i, k: (i, 0)),
            scratch_shapes=[
                pltpu.VMEM((tm, H), w_dtype),        # xn (LN1 output, bf16)
                pltpu.VMEM((tm, H), jnp.float32),    # second-matmul accumulator
                pltpu.VMEM((tm, 1), jnp.float32),    # sum(z)
                pltpu.VMEM((tm, 1), jnp.float32),    # sum(z^2)
                pltpu.VMEM((1, H), jnp.float32),     # colsum(W2)
            ],
        ),
        compiler_params=pltpu.CompilerParams(
            # Token axis shards across TensorCores (v7x megacore); the
            # intermediate axis is a reduction -> arbitrary.
            dimension_semantics=("parallel", "arbitrary"),
            vmem_limit_bytes=vmem_limit,
        ),
        cost_estimate=cost,
    )


def _choose_ti(I, ti_max):
    """Largest inter-tile width that divides I and is lane-aligned (x128) or full."""
    if I <= ti_max:
        return I
    t = (ti_max // 128) * 128
    while t >= 128:
        if I % t == 0:
            return t
        t -= 128
    return I  # no lane-aligned divisor; keep the whole intermediate per step


def _choose_token_tiles(M, tm_max):
    """Balanced token tiles; >=2 tiles when possible so v7x megacore has work."""
    n = max(1, -(-M // tm_max))
    if n == 1 and M > 16:
        n = 2
    tm = _round_up(-(-M // n), 16)
    return tm, n * tm


def make_feed_forward(w1, w2, *, eps=1e-12, matmul_dtype=jnp.bfloat16,
                      tm_max=None, ti_max=512):
    """Build a jitted forward(x) for x of shape (B, S, H).

    w1: (H, 2*I)  -- nn.Linear(hidden, 2*intermediate).weight pre-transposed to (in, out)
    w2: (I, H)    -- nn.Linear(intermediate, hidden).weight  pre-transposed to (in, out)
    """
    H, two_I = w1.shape
    I = two_I // 2
    assert two_I == 2 * I and w2.shape == (I, H)

    # Module-init-time weight prep: cast to the MXU operand dtype ONCE and split
    # the GeGLU value/gate halves so inter tiles stay column-contiguous.
    w1h = jnp.asarray(w1[:, :I], dtype=matmul_dtype)
    w1g = jnp.asarray(w1[:, I:], dtype=matmul_dtype)
    w2m = jnp.asarray(w2, dtype=matmul_dtype)

    vmem_cap = _vmem_capacity_bytes()
    tmx = tm_max if tm_max is not None else (512 if vmem_cap >= 96 * 2**20 else 256)
    ti = _choose_ti(I, ti_max)

    @jax.jit
    def forward(x):
        B, S, Hx = x.shape
        assert Hx == H
        M = B * S
        x2d = x.reshape(M, H)
        tm, M_pad = _choose_token_tiles(M, tmx)
        if M_pad != M:
            x2d = jnp.pad(x2d, ((0, M_pad - M), (0, 0)))  # zero rows are LN-safe
        call = _build_ff_call(M_pad, H, I, tm, ti,
                              jnp.dtype(x2d.dtype), jnp.dtype(matmul_dtype),
                              jnp.dtype(x.dtype), float(eps), int(vmem_cap))
        out2d = call(x2d, w1h, w1g, w2m)
        return out2d[:M].reshape(B, S, H)

    return forward


if __name__ == "__main__":
    eps = 1e-12
    key = jax.random.PRNGKey(0)

    def reference(x, w1, w2):
        def ln(v):
            mu = jnp.mean(v, -1, keepdims=True)
            var = jnp.mean((v - mu) ** 2, -1, keepdims=True)
            return (v - mu) * jax.lax.rsqrt(var + eps)
        I = w2.shape[0]
        y = ln(x) @ w1
        h, g = y[..., :I], y[..., I:]
        c = math.sqrt(2.0 / math.pi)
        z = h * (0.5 * g * (1.0 + jnp.tanh(c * (g + 0.044715 * g ** 3))))
        return ln(z) @ w2

    def trunc_normal(k, shape, std):
        # matches nn.init.trunc_normal_(mean=0, std=std, a=-2*std, b=2*std)
        return std * jax.random.truncated_normal(k, -2.0, 2.0, shape, jnp.float32)

    # (batch, seq, hidden, intermediate, ti_max)
    configs = [
        (2, 8, 128, 256, 512),    # single token tile, single inter tile
        (2, 200, 128, 256, 512),  # 2 balanced token tiles (208 rows) + small tail pad
        (2, 40, 128, 512, 128),   # streams the intermediate dim (4 inter tiles)
    ]

    for (batch, seq, hidden, inter, ti_max) in configs:
        std = math.sqrt(2.0 / (5.0 * hidden))
        kx, kw1, kw2, key = jax.random.split(key, 4)

        x = jax.random.normal(kx, (batch, seq, hidden), jnp.float32)
        # weights stored already transposed to (in, out) for the kernel
        w1 = trunc_normal(kw1, (hidden, 2 * inter), std)
        w2 = trunc_normal(kw2, (inter, hidden), std)

        ff = make_feed_forward(w1, w2, eps=eps, ti_max=ti_max)
        out = jax.block_until_ready(ff(x))
        assert out.shape == x.shape

        # Reference uses the same bf16-rounded weights the kernel consumes; the
        # remaining difference is bf16 rounding of the matmul activations.
        w1r = w1.astype(jnp.bfloat16).astype(jnp.float32)
        w2r = w2.astype(jnp.bfloat16).astype(jnp.float32)
        ref = reference(x, w1r, w2r)
        err = float(jnp.max(jnp.abs(out - ref)))
        assert jnp.allclose(out, ref, atol=2e-2, rtol=2e-2), err

    print("KERNEL_OK")
</pallas_src>

<mosaic_0001>
module attributes {stable_mosaic.version = 11 : i64} {
  func.func @_ff_kernel(%arg0: i32, %arg1: i32, %arg2: memref<16x128xf32, #tpu.memory_space<vmem>>, %arg3: memref<128x256xbf16, #tpu.memory_space<vmem>>, %arg4: memref<128x256xbf16, #tpu.memory_space<vmem>>, %arg5: memref<256x128xbf16, #tpu.memory_space<vmem>>, %arg6: memref<16x128xf32, #tpu.memory_space<vmem>>, %arg7: memref<16x128xbf16, #tpu.memory_space<vmem>>, %arg8: memref<16x128xf32, #tpu.memory_space<vmem>>, %arg9: memref<16x1xf32, #tpu.memory_space<vmem>>, %arg10: memref<16x1xf32, #tpu.memory_space<vmem>>, %arg11: memref<1x128xf32, #tpu.memory_space<vmem>>) attributes {dimension_semantics = [#tpu.dimension_semantics<parallel>, #tpu.dimension_semantics<arbitrary>], iteration_bounds = array<i64: 1, 1>, scalar_prefetch = 0 : i64, scratch_operands = 5 : i64, tpu.core_type = #tpu.core_type<tc>, window_params = [{transform_indices = @transform_0, window_bounds = array<i64: 16, 128>}, {transform_indices = @transform_1, window_bounds = array<i64: 128, 256>}, {transform_indices = @transform_2, window_bounds = array<i64: 128, 256>}, {transform_indices = @transform_3, window_bounds = array<i64: 256, 128>}, {transform_indices = @transform_4, window_bounds = array<i64: 16, 128>}]} {
    %c0_i32 = arith.constant 0 : i32
    %0 = arith.cmpi eq, %arg1, %c0_i32 : i32
    %1 = arith.extui %0 : i1 to i32
    %c0_i32_0 = arith.constant 0 : i32
    %2 = arith.cmpi ne, %1, %c0_i32_0 : i32
    scf.if %2 {
      %c0_35 = arith.constant 0 : index
      %c0_36 = arith.constant 0 : index
      %47 = vector.load %arg2[%c0_35, %c0_36] : memref<16x128xf32, #tpu.memory_space<vmem>>, vector<16x128xf32>
      %cst_37 = arith.constant dense<0.000000e+00> : vector<16xf32>
      %48 = vector.multi_reduction <add>, %47, %cst_37 [1] : vector<16x128xf32> to vector<16xf32>
      %49 = vector.shape_cast %48 : vector<16xf32> to vector<16x1xf32>
      %cst_38 = arith.constant 7.812500e-03 : f32
      %50 = vector.broadcast %cst_38 : f32 to vector<16x1xf32>
      %51 = arith.mulf %49, %50 : vector<16x1xf32>
      %52 = arith.mulf %47, %47 : vector<16x128xf32>
      %cst_39 = arith.constant dense<0.000000e+00> : vector<16xf32>
      %53 = vector.multi_reduction <add>, %52, %cst_39 [1] : vector<16x128xf32> to vector<16xf32>
      %54 = vector.shape_cast %53 : vector<16xf32> to vector<16x1xf32>
      %cst_40 = arith.constant 7.812500e-03 : f32
      %55 = vector.broadcast %cst_40 : f32 to vector<16x1xf32>
      %56 = arith.mulf %54, %55 : vector<16x1xf32>
      %57 = arith.mulf %51, %51 : vector<16x1xf32>
      %58 = arith.subf %56, %57 : vector<16x1xf32>
      %cst_41 = arith.constant 0.000000e+00 : f32
      %59 = vector.broadcast %cst_41 : f32 to vector<16x1xf32>
      %60 = arith.maximumf %58, %59 : vector<16x1xf32>
      %61 = vector.broadcast %51 : vector<16x1xf32> to vector<16x128xf32>
      %62 = arith.subf %47, %61 : vector<16x128xf32>
      %cst_42 = arith.constant 9.99999996E-13 : f32
      %63 = vector.broadcast %cst_42 : f32 to vector<16x1xf32>
      %64 = arith.addf %60, %63 : vector<16x1xf32>
      %65 = math.rsqrt %64 : vector<16x1xf32>
      %66 = vector.broadcast %65 : vector<16x1xf32> to vector<16x128xf32>
      %67 = arith.mulf %62, %66 : vector<16x128xf32>
      %68 = arith.truncf %67 : vector<16x128xf32> to vector<16x128xbf16>
      %c0_43 = arith.constant 0 : index
      %c0_44 = arith.constant 0 : index
      %69 = vector.load %arg7[%c0_43, %c0_44] : memref<16x128xbf16, #tpu.memory_space<vmem>>, vector<16x128xbf16>
      tpu.vector_store %arg7[%c0_43, %c0_44], %68 {strides = array<i32>} : memref<16x128xbf16, #tpu.memory_space<vmem>>, vector<16x128xbf16>,
      %cst_45 = arith.constant 0.000000e+00 : f32
      %70 = vector.broadcast %cst_45 : f32 to vector<16x128xf32>
      %c0_46 = arith.constant 0 : index
      %c0_47 = arith.constant 0 : index
      %71 = vector.load %arg8[%c0_46, %c0_47] : memref<16x128xf32, #tpu.memory_space<vmem>>, vector<16x128xf32>
      tpu.vector_store %arg8[%c0_46, %c0_47], %70 {strides = array<i32>} : memref<16x128xf32, #tpu.memory_space<vmem>>, vector<16x128xf32>,
      %cst_48 = arith.constant 0.000000e+00 : f32
      %72 = vector.broadcast %cst_48 : f32 to vector<16x1xf32>
      %c0_49 = arith.constant 0 : index
      %c0_50 = arith.constant 0 : index
      %73 = vector.load %arg9[%c0_49, %c0_50] : memref<16x1xf32, #tpu.memory_space<vmem>>, vector<16x1xf32>
      tpu.vector_store %arg9[%c0_49, %c0_50], %72 {strides = array<i32>} : memref<16x1xf32, #tpu.memory_space<vmem>>, vector<16x1xf32>,
      %cst_51 = arith.constant 0.000000e+00 : f32
      %74 = vector.broadcast %cst_51 : f32 to vector<16x1xf32>
      %c0_52 = arith.constant 0 : index
      %c0_53 = arith.constant 0 : index
      %75 = vector.load %arg10[%c0_52, %c0_53] : memref<16x1xf32, #tpu.memory_space<vmem>>, vector<16x1xf32>
      tpu.vector_store %arg10[%c0_52, %c0_53], %74 {strides = array<i32>} : memref<16x1xf32, #tpu.memory_space<vmem>>, vector<16x1xf32>,
      %cst_54 = arith.constant 0.000000e+00 : f32
      %76 = vector.broadcast %cst_54 : f32 to vector<1x128xf32>
      %c0_55 = arith.constant 0 : index
      %c0_56 = arith.constant 0 : index
      %77 = vector.load %arg11[%c0_55, %c0_56] : memref<1x128xf32, #tpu.memory_space<vmem>>, vector<1x128xf32>
      tpu.vector_store %arg11[%c0_55, %c0_56], %76 {strides = array<i32>} : memref<1x128xf32, #tpu.memory_space<vmem>>, vector<1x128xf32>,
    } else {
    }
    %c0 = arith.constant 0 : index
    %c0_1 = arith.constant 0 : index
    %3 = vector.load %arg7[%c0, %c0_1] : memref<16x128xbf16, #tpu.memory_space<vmem>>, vector<16x128xbf16>
    %c0_2 = arith.constant 0 : index
    %c0_3 = arith.constant 0 : index
    %4 = vector.load %arg3[%c0_2, %c0_3] : memref<128x256xbf16, #tpu.memory_space<vmem>>, vector<128x256xbf16>
    %cst = arith.constant dense<0.000000e+00> : vector<16x256xf32>
    %5 = tpu.matmul %3, %4, %cst {dimension_numbers = #tpu.dot_dimension_numbers<[1], [0], [0], [1], [0, 0, 1, 1], [], []>} : vector<16x128xbf16>, vector<128x256xbf16>, vector<16x256xf32> -> vector<16x256xf32>
    %c0_4 = arith.constant 0 : index
    %c0_5 = arith.constant 0 : index
    %6 = vector.load %arg4[%c0_4, %c0_5] : memref<128x256xbf16, #tpu.memory_space<vmem>>, vector<128x256xbf16>
    %cst_6 = arith.constant dense<0.000000e+00> : vector<16x256xf32>
    %7 = tpu.matmul %3, %6, %cst_6 {dimension_numbers = #tpu.dot_dimension_numbers<[1], [0], [0], [1], [0, 0, 1, 1], [], []>} : vector<16x128xbf16>, vector<128x256xbf16>, vector<16x256xf32> -> vector<16x256xf32>
    %8 = arith.mulf %7, %7 : vector<16x256xf32>
    %cst_7 = arith.constant 0.0356774069 : f32
    %9 = vector.broadcast %cst_7 : f32 to vector<16x256xf32>
    %10 = arith.mulf %9, %8 : vector<16x256xf32>
    %cst_8 = arith.constant 0.797884583 : f32
    %11 = vector.broadcast %cst_8 : f32 to vector<16x256xf32>
    %12 = arith.addf %11, %10 : vector<16x256xf32>
    %13 = arith.mulf %7, %12 : vector<16x256xf32>
    %14 = math.tanh %13 : vector<16x256xf32>
    %cst_9 = arith.constant 5.000000e-01 : f32
    %15 = vector.broadcast %cst_9 : f32 to vector<16x256xf32>
    %16 = arith.mulf %15, %5 : vector<16x256xf32>
    %cst_10 = arith.constant 1.000000e+00 : f32
    %17 = vector.broadcast %cst_10 : f32 to vector<16x256xf32>
    %18 = arith.addf %17, %14 : vector<16x256xf32>
    %19 = arith.mulf %7, %18 : vector<16x256xf32>
    %20 = arith.mulf %16, %19 : vector<16x256xf32>
    %c0_11 = arith.constant 0 : index
    %c0_12 = arith.constant 0 : index
    %21 = vector.load %arg9[%c0_11, %c0_12] : memref<16x1xf32, #tpu.memory_space<vmem>>, vector<16x1xf32>
    %cst_13 = arith.constant dense<0.000000e+00> : vector<16xf32>
    %22 = vector.multi_reduction <add>, %20, %cst_13 [1] : vector<16x256xf32> to vector<16xf32>
    %23 = vector.shape_cast %22 : vector<16xf32> to vector<16x1xf32>
    %24 = arith.addf %21, %23 : vector<16x1xf32>
    %c0_14 = arith.constant 0 : index
    %c0_15 = arith.constant 0 : index
    %25 = vector.load %arg9[%c0_14, %c0_15] : memref<16x1xf32, #tpu.memory_space<vmem>>, vector<16x1xf32>
    tpu.vector_store %arg9[%c0_14, %c0_15], %24 {strides = array<i32>} : memref<16x1xf32, #tpu.memory_space<vmem>>, vector<16x1xf32>,
    %c0_16 = arith.constant 0 : index
    %c0_17 = arith.constant 0 : index
    %26 = vector.load %arg10[%c0_16, %c0_17] : memref<16x1xf32, #tpu.memory_space<vmem>>, vector<16x1xf32>
    %27 = arith.mulf %20, %20 : vector<16x256xf32>
    %cst_18 = arith.constant dense<0.000000e+00> : vector<16xf32>
    %28 = vector.multi_reduction <add>, %27, %cst_18 [1] : vector<16x256xf32> to vector<16xf32>
    %29 = vector.shape_cast %28 : vector<16xf32> to vector<16x1xf32>
    %30 = arith.addf %26, %29 : vector<16x1xf32>
    %c0_19 = arith.constant 0 : index
    %c0_20 = arith.constant 0 : index
    %31 = vector.load %arg10[%c0_19, %c0_20] : memref<16x1xf32, #tpu.memory_space<vmem>>, vector<16x1xf32>
    tpu.vector_store %arg10[%c0_19, %c0_20], %30 {strides = array<i32>} : memref<16x1xf32, #tpu.memory_space<vmem>>, vector<16x1xf32>,
    %c0_21 = arith.constant 0 : index
    %c0_22 = arith.constant 0 : index
    %32 = vector.load %arg5[%c0_21, %c0_22] : memref<256x128xbf16, #tpu.memory_space<vmem>>, vector<256x128xbf16>
    %c0_23 = arith.constant 0 : index
    %c0_24 = arith.constant 0 : index
    %33 = vector.load %arg11[%c0_23, %c0_24] : memref<1x128xf32, #tpu.memory_space<vmem>>, vector<1x128xf32>
    %34 = arith.extf %32 : vector<256x128xbf16> to vector<256x128xf32>
    %cst_25 = arith.constant dense<0.000000e+00> : vector<128xf32>
    %35 = vector.multi_reduction <add>, %34, %cst_25 [0] : vector<256x128xf32> to vector<128xf32>
    %36 = vector.shape_cast %35 : vector<128xf32> to vector<1x128xf32>
    %37 = arith.addf %33, %36 : vector<1x128xf32>
    %c0_26 = arith.constant 0 : index
    %c0_27 = arith.constant 0 : index
    %38 = vector.load %arg11[%c0_26, %c0_27] : memref<1x128xf32, #tpu.memory_space<vmem>>, vector<1x128xf32>
    tpu.vector_store %arg11[%c0_26, %c0_27], %37 {strides = array<i32>} : memref<1x128xf32, #tpu.memory_space<vmem>>, vector<1x128xf32>,
    %c0_28 = arith.constant 0 : index
    %c0_29 = arith.constant 0 : index
    %39 = vector.load %arg8[%c0_28, %c0_29] : memref<16x128xf32, #tpu.memory_space<vmem>>, vector<16x128xf32>
    %40 = arith.truncf %20 : vector<16x256xf32> to vector<16x256xbf16>
    %cst_30 = arith.constant dense<0.000000e+00> : vector<16x128xf32>
    %41 = tpu.matmul %40, %32, %cst_30 {dimension_numbers = #tpu.dot_dimension_numbers<[1], [0], [0], [1], [0, 0, 1, 1], [], []>} : vector<16x256xbf16>, vector<256x128xbf16>, vector<16x128xf32> -> vector<16x128xf32>
    %42 = arith.addf %39, %41 : vector<16x128xf32>
    %c0_31 = arith.constant 0 : index
    %c0_32 = arith.constant 0 : index
    %43 = vector.load %arg8[%c0_31, %c0_32] : memref<16x128xf32, #tpu.memory_space<vmem>>, vector<16x128xf32>
    tpu.vector_store %arg8[%c0_31, %c0_32], %42 {strides = array<i32>} : memref<16x128xf32, #tpu.memory_space<vmem>>, vector<16x128xf32>,
    %c0_i32_33 = arith.constant 0 : i32
    %44 = arith.cmpi eq, %arg1, %c0_i32_33 : i32
    %45 = arith.extui %44 : i1 to i32
    %c0_i32_34 = arith.constant 0 : i32
    %46 = arith.cmpi ne, %45, %c0_i32_34 : i32
    scf.if %46 {
      %c0_35 = arith.constant 0 : index
      %c0_36 = arith.constant 0 : index
      %47 = vector.load %arg9[%c0_35, %c0_36] : memref<16x1xf32, #tpu.memory_space<vmem>>, vector<16x1xf32>
      %cst_37 = arith.constant 3.906250e-03 : f32
      %48 = vector.broadcast %cst_37 : f32 to vector<16x1xf32>
      %49 = arith.mulf %47, %48 : vector<16x1xf32>
      %c0_38 = arith.constant 0 : index
      %c0_39 = arith.constant 0 : index
      %50 = vector.load %arg10[%c0_38, %c0_39] : memref<16x1xf32, #tpu.memory_space<vmem>>, vector<16x1xf32>
      %cst_40 = arith.constant 3.906250e-03 : f32
      %51 = vector.broadcast %cst_40 : f32 to vector<16x1xf32>
      %52 = arith.mulf %50, %51 : vector<16x1xf32>
      %53 = arith.mulf %49, %49 : vector<16x1xf32>
      %54 = arith.subf %52, %53 : vector<16x1xf32>
      %cst_41 = arith.constant 0.000000e+00 : f32
      %55 = vector.broadcast %cst_41 : f32 to vector<16x1xf32>
      %56 = arith.maximumf %54, %55 : vector<16x1xf32>
      %cst_42 = arith.constant 9.99999996E-13 : f32
      %57 = vector.broadcast %cst_42 : f32 to vector<16x1xf32>
      %58 = arith.addf %56, %57 : vector<16x1xf32>
      %59 = math.rsqrt %58 : vector<16x1xf32>
      %c0_43 = arith.constant 0 : index
      %c0_44 = arith.constant 0 : index
      %60 = vector.load %arg8[%c0_43, %c0_44] : memref<16x128xf32, #tpu.memory_space<vmem>>, vector<16x128xf32>
      %c0_45 = arith.constant 0 : index
      %c0_46 = arith.constant 0 : index
      %61 = vector.load %arg11[%c0_45, %c0_46] : memref<1x128xf32, #tpu.memory_space<vmem>>, vector<1x128xf32>
      %62 = vector.broadcast %49 : vector<16x1xf32> to vector<16x128xf32>
      %63 = vector.broadcast %61 : vector<1x128xf32> to vector<16x128xf32>
      %64 = arith.mulf %62, %63 : vector<16x128xf32>
      %65 = arith.subf %60, %64 : vector<16x128xf32>
      %66 = vector.broadcast %59 : vector<16x1xf32> to vector<16x128xf32>
      %67 = arith.mulf %65, %66 : vector<16x128xf32>
      %c0_47 = arith.constant 0 : index
      %c0_48 = arith.constant 0 : index
      %68 = vector.load %arg6[%c0_47, %c0_48] : memref<16x128xf32, #tpu.memory_space<vmem>>, vector<16x128xf32>
      tpu.vector_store %arg6[%c0_47, %c0_48], %67 {strides = array<i32>} : memref<16x128xf32, #tpu.memory_space<vmem>>, vector<16x128xf32>,
    } else {
    }
    return
  }
  func.func @transform_0(%arg0: i32, %arg1: i32) -> (i32, i32) {
    %c0_i32 = arith.constant 0 : i32
    %c0_i32_0 = arith.constant 0 : i32
    return %arg0, %c0_i32 : i32, i32
  }
  func.func @transform_1(%arg0: i32, %arg1: i32) -> (i32, i32) {
    %c0_i32 = arith.constant 0 : i32
    %c0_i32_0 = arith.constant 0 : i32
    return %c0_i32, %arg1 : i32, i32
  }
  func.func @transform_2(%arg0: i32, %arg1: i32) -> (i32, i32) {
    %c0_i32 = arith.constant 0 : i32
    %c0_i32_0 = arith.constant 0 : i32
    return %c0_i32, %arg1 : i32, i32
  }
  func.func @transform_3(%arg0: i32, %arg1: i32) -> (i32, i32) {
    %c0_i32 = arith.constant 0 : i32
    %c0_i32_0 = arith.constant 0 : i32
    return %arg1, %c0_i32 : i32, i32
  }
  func.func @transform_4(%arg0: i32, %arg1: i32) -> (i32, i32) {
    %c0_i32 = arith.constant 0 : i32
    %c0_i32_0 = arith.constant 0 : i32
    return %arg0, %c0_i32 : i32, i32
  }
}

</mosaic_0001>

<llo_original>
// kernel: forward.1
$region0: #{forward.1}
  #allocation0 [shape = 'u32[]', space=smem, size = 0x4, offset = 0x4, fixed_abs, tag = 'smem constant byte address 0x4 - core index']
  #allocation1 [shape = 'u32[144,128]{1,0:T(1,128)}', space=vmem, size = 0x12000, scoped, tag = 'internal scratch']
  #allocation2 [shape = 'bf16[16,128]{1,0:T(8,128)(2,1)}', space=vmem, size = 0x1000, scoped, tag = 'scratch operand']
  #allocation3 [shape = 'f32[16,128]{1,0:T(8,128)}', space=vmem, size = 0x2000, scoped, tag = 'scratch operand']
  #allocation4 [shape = 'f32[16,1]{1,0:T(8,128)}', space=vmem, size = 0x2000, scoped, tag = 'scratch operand']
  #allocation5 [shape = 'f32[16,1]{1,0:T(8,128)}', space=vmem, size = 0x2000, scoped, tag = 'scratch operand']
  #allocation6 [shape = 'f32[1,128]{1,0:T(1,128)}', space=vmem, size = 0x200, scoped, tag = 'scratch operand']
  %s0 = inlined_call_operand.hbm [shape: f32[16,128], index: 0, kind: input, shape index: {}]
  %s1 = inlined_call_operand.hbm [shape: bf16[128,256], index: 1, kind: input, shape index: {}]
  %s2 = inlined_call_operand.hbm [shape: bf16[128,256], index: 2, kind: input, shape index: {}]
  %s3 = inlined_call_operand.hbm [shape: bf16[256,128], index: 3, kind: input, shape index: {}]
  %s4 = inlined_call_operand.hbm [shape: f32[16,128], index: 4, kind: output, shape index: {}]
  %s5 = sld [smem:[#allocation0]]
  $region50: #{forward.1} parent=0
    _
  %s7 = ssub.s32 1, %s5
  %s8 = scalar_select 0, %s7, %s5
  $region1: #{forward.1} parent=0
    #allocation7 [shape = 'u8[8192]{0}', space=vmem, size = 0x2000, scoped, tag = 'input window, operand 0, single buffered']
    #allocation8 [shape = 's32[1]{0}', space=sflag, size = 0x4, scoped, tag = 'scoped memory for forward.1']
    #allocation9 [shape = 's32[1]{0}', space=sflag, size = 0x4, scoped, tag = 'scoped memory for forward.1']
    #allocation10 [shape = 'u8[65536]{0}', space=vmem, size = 0x10000, scoped, tag = 'input window, operand 1, single buffered']
    #allocation11 [shape = 's32[1]{0}', space=sflag, size = 0x4, scoped, tag = 'scoped memory for forward.1']
    #allocation12 [shape = 'u8[65536]{0}', space=vmem, size = 0x10000, scoped, tag = 'input window, operand 2, single buffered']
    #allocation13 [shape = 'u8[65536]{0}', space=vmem, size = 0x10000, scoped, tag = 'input window, operand 3, single buffered']
    #allocation14 [shape = 's32[1]{0}', space=sflag, size = 0x4, scoped, tag = 'scoped memory for forward.1']
    #allocation15 [shape = 'u8[8192]{0}', space=vmem, size = 0x2000, scoped, tag = 'output window, operand 0, single buffered']
    %9 = vsyncpa [#allocation8], 0
    %10 = vsyncpa [#allocation11], 0
    %11 = vsyncpa [#allocation14], 0
    %12 = vsyncpa [#allocation9], 0
    // Predicated region
    $region2: #{forward.1} parent=1 // pred_check
      _
    $region3: #{forward.1} parent=1 // pred_check_branch
      %14 = sbr.rel (0) target = $region5
    $region4: #{forward.1} parent=1 // pred_region
      %s16 = ssub.s32 256, 256
      %17 = vsyncadd [#allocation8], %s16
      %s18 = sshll.u32 [#allocation7], 4
      %s19 = int_to_ptr.vmem [resolvable:$true] %s18
      %24 = dma.hbm_to_vmem [thread:$0]  %s0, 256, %s19, [#allocation8], 128, 128, 8
    $region5: #{forward.1} parent=1 // pred_fallthru
      _
    // Predicated region
    $region6: #{forward.1} parent=1 // pred_check
      _
    $region7: #{forward.1} parent=1 // pred_check_branch
      %26 = sbr.rel (0) target = $region9
    $region8: #{forward.1} parent=1 // pred_region
      %s28 = ssub.s32 2048, 2048
      %29 = vsyncadd [#allocation11], %s28
      %s30 = sshll.u32 [#allocation10], 4
      %s31 = int_to_ptr.vmem [resolvable:$true] %s30
      %36 = dma.hbm_to_vmem [thread:$0]  %s1, 2048, %s31, [#allocation11], 128, 128, 8
    $region9: #{forward.1} parent=1 // pred_fallthru
      _
    // Predicated region
    $region10: #{forward.1} parent=1 // pred_check
      _
    $region11: #{forward.1} parent=1 // pred_check_branch
      %38 = sbr.rel (0) target = $region13
    $region12: #{forward.1} parent=1 // pred_region
      %s40 = ssub.s32 2048, 2048
      %41 = vsyncadd [#allocation11], %s40
      %s42 = sshll.u32 [#allocation12], 4
      %s43 = int_to_ptr.vmem [resolvable:$true] %s42
      %48 = dma.hbm_to_vmem [thread:$0]  %s2, 2048, %s43, [#allocation11], 128, 128, 8
    $region13: #{forward.1} parent=1 // pred_fallthru
      _
    // Predicated region
    $region14: #{forward.1} parent=1 // pred_check
      _
    $region15: #{forward.1} parent=1 // pred_check_branch
      %50 = sbr.rel (0) target = $region17
    $region16: #{forward.1} parent=1 // pred_region
      %s52 = ssub.s32 2048, 2048
      %53 = vsyncadd [#allocation14], %s52
      %s54 = sshll.u32 [#allocation13], 4
      %s55 = int_to_ptr.vmem [resolvable:$true] %s54
      %60 = dma.hbm_to_vmem [thread:$0]  %s3, 2048, %s55, [#allocation14], 64, 64, 4
    $region17: #{forward.1} parent=1 // pred_fallthru
      _
    // Predicated region
    $region18: #{forward.1} parent=1 // pred_check
      _
    $region19: #{forward.1} parent=1 // pred_check_branch
      %62 = sbr.rel (0) target = $region21
    $region20: #{forward.1} parent=1 // pred_region
      %63 = dma.done [#allocation8], 256
    $region21: #{forward.1} parent=1 // pred_fallthru
      _
    // Predicated region
    $region22: #{forward.1} parent=1 // pred_check
      _
    $region23: #{forward.1} parent=1 // pred_check_branch
      %65 = sbr.rel (0) target = $region25
    $region24: #{forward.1} parent=1 // pred_region
      %66 = dma.done [#allocation11], 2048
    $region25: #{forward.1} parent=1 // pred_fallthru
      _
    // Predicated region
    $region26: #{forward.1} parent=1 // pred_check
      _
    $region27: #{forward.1} parent=1 // pred_check_branch
      %68 = sbr.rel (0) target = $region29
    $region28: #{forward.1} parent=1 // pred_region
      %69 = dma.done [#allocation11], 2048
    $region29: #{forward.1} parent=1 // pred_fallthru
      _
    // Predicated region
    $region30: #{forward.1} parent=1 // pred_check
      _
    $region31: #{forward.1} parent=1 // pred_check_branch
      %71 = sbr.rel (0) target = $region33
    $region32: #{forward.1} parent=1 // pred_region
      %72 = dma.done [#allocation14], 2048
    $region33: #{forward.1} parent=1 // pred_fallthru
      _
    %p74 = scmp.eq.s32.totalorder 0, 0
    // Predicated region
    $region34: #{forward.1} parent=1 // pred_check
      %p75 = pneg %p74
    $region35: #{forward.1} parent=1 // pred_check_branch
      %77 = sbr.rel (%p75) target = $region37
    $region36: #{forward.1} parent=1 // pred_region
      %v78 = vld [vmem:[#allocation7] sm:$0xff]
      %v79 = vld [vmem:[#allocation7 + $0x8] sm:$0xff]
      %80 = vadd.xlane.f32.xlu0 %v78
      %v81 = vpop.xlane.xlu0 %80
      %82 = vadd.xlane.f32.xlu0 %v79
      %v83 = vpop.xlane.xlu0 %82
      %v84 = vmul.f32 %v81, 0.0078125
      %v85 = vmul.f32 %v83, 0.0078125
      %v86 = vmul.f32 %v78, %v78
      %v87 = vmul.f32 %v79, %v79
      %88 = vadd.xlane.f32.xlu0 %v86
      %v89 = vpop.xlane.xlu0 %88
      %90 = vadd.xlane.f32.xlu0 %v87
      %v91 = vpop.xlane.xlu0 %90
      %v92 = vmul.f32 %v89, 0.0078125
      %v93 = vmul.f32 %v91, 0.0078125
      %v94 = vmul.f32 %v84, %v84
      %v95 = vmul.f32 %v85, %v85
      %v96 = vsub.f32 %v92, %v94
      %v97 = vsub.f32 %v93, %v95
      %v98 = vmax.f32 %v96, 0.0
      %v99 = vmax.f32 %v97, 0.0
      %v100 = vsub.f32 %v78, %v84
      %v101 = vsub.f32 %v79, %v85
      %v102 = vadd.f32 %v98, 1e-12
      %v103 = vadd.f32 %v99, 1e-12
      %v104 = vrsqrt.pop %v102
      %v105 = vrsqrt.pop %v103
      %v106 = vmul.f32 %v100, %v104
      %v107 = vmul.f32 %v101, %v105
      %v108 = vpack.c.bf16 %v107, %v106
      %v110 = vunpack.c.l.b16 %v108
      %v111 = vunpack.c.h.b16 %v108
      %v112 = vpack.c.b16 %v110, %v110
      %v113 = vpack.c.b16 %v111, %v111
      %116 = vst [vmem:[#allocation2] sm:$0xf] %v112
      %117 = vst [vmem:[#allocation2 + $0x4] sm:$0xf] %v113
      %118 = vst [vmem:[#allocation3] sm:$0xff] 0.0
      %119 = vst [vmem:[#allocation3 + $0x8] sm:$0xff] 0.0
      %vm120 = vcmask 7168
      %121 = vst.msk [vmem:[#allocation4] sm:$0xff] %vm120, 0.0
      %122 = vst.msk [vmem:[#allocation4 + $0x8] sm:$0xff] %vm120, 0.0
      %123 = vst.msk [vmem:[#allocation5] sm:$0xff] %vm120, 0.0
      %124 = vst.msk [vmem:[#allocation5 + $0x8] sm:$0xff] %vm120, 0.0
      %125 = vst [vmem:[#allocation6] sm:$0x1] 0.0
    $region37: #{forward.1} parent=1 // pred_fallthru
      _
    %v126 = vld [vmem:[#allocation2] sm:$0xf]
    %v127 = vld [vmem:[#allocation2 + $0x4] sm:$0xf]
    %v128 = vld [vmem:[#allocation10] sm:$0xff]
    %v129 = vld [vmem:[#allocation10 + $0x8] sm:$0xff]
    %v130 = vld [vmem:[#allocation10 + $0x10] sm:$0xff]
    %v131 = vld [vmem:[#allocation10 + $0x18] sm:$0xff]
    %v132 = vld [vmem:[#allocation10 + $0x20] sm:$0xff]
    %v133 = vld [vmem:[#allocation10 + $0x28] sm:$0xff]
    %v134 = vld [vmem:[#allocation10 + $0x30] sm:$0xff]
    %v135 = vld [vmem:[#allocation10 + $0x38] sm:$0xff]
    %v136 = vld [vmem:[#allocation10 + $0x40] sm:$0xff]
    %v137 = vld [vmem:[#allocation10 + $0x48] sm:$0xff]
    %v138 = vld [vmem:[#allocation10 + $0x50] sm:$0xff]
    %v139 = vld [vmem:[#allocation10 + $0x58] sm:$0xff]
    %v140 = vld [vmem:[#allocation10 + $0x60] sm:$0xff]
    %v141 = vld [vmem:[#allocation10 + $0x68] sm:$0xff]
    %v142 = vld [vmem:[#allocation10 + $0x70] sm:$0xff]
    %v143 = vld [vmem:[#allocation10 + $0x78] sm:$0xff]
    %v146 = vunpack.c.l.b16 %v126
    %v147 = vunpack.c.l.b16 %v127
    %v148 = vpack.c.b16 %v147, %v146
    %v166 = vunpack.c.l.b16 %v128
    %v167 = vunpack.c.h.b16 %v128
    %v168 = vunpack.c.l.b16 %v129
    %v169 = vunpack.c.h.b16 %v129
    %v170 = vunpack.c.l.b16 %v130
    %v171 = vunpack.c.h.b16 %v130
    %v172 = vunpack.c.l.b16 %v131
    %v173 = vunpack.c.h.b16 %v131
    %v174 = vunpack.c.l.b16 %v132
    %v175 = vunpack.c.h.b16 %v132
    %v176 = vunpack.c.l.b16 %v133
    %v177 = vunpack.c.h.b16 %v133
    %v178 = vunpack.c.l.b16 %v134
    %v179 = vunpack.c.h.b16 %v134
    %v180 = vunpack.c.l.b16 %v135
    %v181 = vunpack.c.h.b16 %v135
    %v182 = vunpack.c.l.b16 %v136
    %v183 = vunpack.c.h.b16 %v136
    %v184 = vunpack.c.l.b16 %v137
    %v185 = vunpack.c.h.b16 %v137
    %v186 = vunpack.c.l.b16 %v138
    %v187 = vunpack.c.h.b16 %v138
    %v188 = vunpack.c.l.b16 %v139
    %v189 = vunpack.c.h.b16 %v139
    %v190 = vunpack.c.l.b16 %v140
    %v191 = vunpack.c.h.b16 %v140
    %v192 = vunpack.c.l.b16 %v141
    %v193 = vunpack.c.h.b16 %v141
    %v194 = vunpack.c.l.b16 %v142
    %v195 = vunpack.c.h.b16 %v142
    %v196 = vunpack.c.l.b16 %v143
    %v197 = vunpack.c.h.b16 %v143
    %v198 = vpack.c.b16 %v168, %v166
    %v199 = vpack.c.b16 %v169, %v167
    %v200 = vpack.c.b16 %v172, %v170
    %v201 = vpack.c.b16 %v173, %v171
    %v202 = vpack.c.b16 %v176, %v174
    %v203 = vpack.c.b16 %v177, %v175
    %v204 = vpack.c.b16 %v180, %v178
    %v205 = vpack.c.b16 %v181, %v179
    %v206 = vpack.c.b16 %v184, %v182
    %v207 = vpack.c.b16 %v185, %v183
    %v208 = vpack.c.b16 %v188, %v186
    %v209 = vpack.c.b16 %v189, %v187
    %v210 = vpack.c.b16 %v192, %v190
    %v211 = vpack.c.b16 %v193, %v191
    %v212 = vpack.c.b16 %v196, %v194
    %v213 = vpack.c.b16 %v197, %v195
    %230 = vmatprep.subr.bf16.mxu0 %v213
    %231 = vmatpush1.bf16.msra.mxu0 %v212
    %232 = vmatprep.subr.bf16.mxu0 %v211
    %233 = vmatpush1.bf16.msra.mxu0 %v210
    %234 = vmatprep.subr.bf16.mxu0 %v209
    %235 = vmatpush1.bf16.msra.mxu0 %v208
    %236 = vmatprep.subr.bf16.mxu0 %v207
    %237 = vmatpush1.bf16.msra.mxu0 %v206
    %238 = vmatprep.subr.bf16.mxu0 %v205
    %239 = vmatpush1.bf16.msra.mxu0 %v204
    %240 = vmatprep.subr.bf16.mxu0 %v203
    %241 = vmatpush1.bf16.msra.mxu0 %v202
    %242 = vmatprep.subr.bf16.mxu0 %v201
    %243 = vmatpush1.bf16.msra.mxu0 %v200
    %244 = vmatprep.subr.bf16.mxu0 %v199
    %245 = vmatpush1.bf16.msra.mxu0 %v198
    %246 = vmatprep.subr.bf16.mxu0 0
    %247 = vmatpush2.bf16.msra.mxu0 0
    %248 = vmatprep.subr.bf16.mxu0 0
    %249 = vmatpush2.bf16.msra.mxu0 0
    %250 = vmatprep.subr.bf16.mxu0 0
    %251 = vmatpush2.bf16.msra.mxu0 0
    %252 = vmatprep.subr.bf16.mxu0 0
    %253 = vmatpush2.bf16.msra.mxu0 0
    %254 = vmatprep.subr.bf16.mxu0 0
    %255 = vmatpush2.bf16.msra.mxu0 0
    %256 = vmatprep.subr.bf16.mxu0 0
    %257 = vmatpush2.bf16.msra.mxu0 0
    %258 = vmatprep.subr.bf16.mxu0 0
    %259 = vmatpush2.bf16.msra.mxu0 0
    %260 = vmatprep.subr.bf16.mxu0 0
    %261 = vmatpush2.bf16.msra.mxu0 0
    %262 = vmatprep.mubr.bf16.mxu0 0
    %263 = vmatmul.mubr.bf16.gmra.mxu0 %v148
    %v264 = vpop.f32.mrf.mxu0
    %v265 = vadd.f32 0.0, %v264
    %v266 = vpop.f32.mrf.mxu0
    %v267 = vadd.f32 0.0, %v266
    %v268 = vpop.f32.mrf.mxu0
    %v269 = vadd.f32 0.0, %v268
    %v270 = vpop.f32.mrf.mxu0
    %v271 = vadd.f32 0.0, %v270
    %272 = vdwg.mxu0
    %v273 = vld [vmem:[#allocation12] sm:$0xff]
    %v274 = vld [vmem:[#allocation12 + $0x8] sm:$0xff]
    %v275 = vld [vmem:[#allocation12 + $0x10] sm:$0xff]
    %v276 = vld [vmem:[#allocation12 + $0x18] sm:$0xff]
    %v277 = vld [vmem:[#allocation12 + $0x20] sm:$0xff]
    %v278 = vld [vmem:[#allocation12 + $0x28] sm:$0xff]
    %v279 = vld [vmem:[#allocation12 + $0x30] sm:$0xff]
    %v280 = vld [vmem:[#allocation12 + $0x38] sm:$0xff]
    %v281 = vld [vmem:[#allocation12 + $0x40] sm:$0xff]
    %v282 = vld [vmem:[#allocation12 + $0x48] sm:$0xff]
    %v283 = vld [vmem:[#allocation12 + $0x50] sm:$0xff]
    %v284 = vld [vmem:[#allocation12 + $0x58] sm:$0xff]
    %v285 = vld [vmem:[#allocation12 + $0x60] sm:$0xff]
    %v286 = vld [vmem:[#allocation12 + $0x68] sm:$0xff]
    %v287 = vld [vmem:[#allocation12 + $0x70] sm:$0xff]
    %v288 = vld [vmem:[#allocation12 + $0x78] sm:$0xff]
    %v305 = vunpack.c.l.b16 %v273
    %v306 = vunpack.c.h.b16 %v273
    %v307 = vunpack.c.l.b16 %v274
    %v308 = vunpack.c.h.b16 %v274
    %v309 = vunpack.c.l.b16 %v275
    %v310 = vunpack.c.h.b16 %v275
    %v311 = vunpack.c.l.b16 %v276
    %v312 = vunpack.c.h.b16 %v276
    %v313 = vunpack.c.l.b16 %v277
    %v314 = vunpack.c.h.b16 %v277
    %v315 = vunpack.c.l.b16 %v278
    %v316 = vunpack.c.h.b16 %v278
    %v317 = vunpack.c.l.b16 %v279
    %v318 = vunpack.c.h.b16 %v279
    %v319 = vunpack.c.l.b16 %v280
    %v320 = vunpack.c.h.b16 %v280
    %v321 = vunpack.c.l.b16 %v281
    %v322 = vunpack.c.h.b16 %v281
    %v323 = vunpack.c.l.b16 %v282
    %v324 = vunpack.c.h.b16 %v282
    %v325 = vunpack.c.l.b16 %v283
    %v326 = vunpack.c.h.b16 %v283
    %v327 = vunpack.c.l.b16 %v284
    %v328 = vunpack.c.h.b16 %v284
    %v329 = vunpack.c.l.b16 %v285
    %v330 = vunpack.c.h.b16 %v285
    %v331 = vunpack.c.l.b16 %v286
    %v332 = vunpack.c.h.b16 %v286
    %v333 = vunpack.c.l.b16 %v287
    %v334 = vunpack.c.h.b16 %v287
    %v335 = vunpack.c.l.b16 %v288
    %v336 = vunpack.c.h.b16 %v288
    %v337 = vpack.c.b16 %v307, %v305
    %v338 = vpack.c.b16 %v308, %v306
    %v339 = vpack.c.b16 %v311, %v309
    %v340 = vpack.c.b16 %v312, %v310
    %v341 = vpack.c.b16 %v315, %v313
    %v342 = vpack.c.b16 %v316, %v314
    %v343 = vpack.c.b16 %v319, %v317
    %v344 = vpack.c.b16 %v320, %v318
    %v345 = vpack.c.b16 %v323, %v321
    %v346 = vpack.c.b16 %v324, %v322
    %v347 = vpack.c.b16 %v327, %v325
    %v348 = vpack.c.b16 %v328, %v326
    %v349 = vpack.c.b16 %v331, %v329
    %v350 = vpack.c.b16 %v332, %v330
    %v351 = vpack.c.b16 %v335, %v333
    %v352 = vpack.c.b16 %v336, %v334
    %369 = vmatprep.subr.bf16.mxu0 %v352
    %370 = vmatpush1.bf16.msra.mxu0 %v351
    %371 = vmatprep.subr.bf16.mxu0 %v350
    %372 = vmatpush1.bf16.msra.mxu0 %v349
    %373 = vmatprep.subr.bf16.mxu0 %v348
    %374 = vmatpush1.bf16.msra.mxu0 %v347
    %375 = vmatprep.subr.bf16.mxu0 %v346
    %376 = vmatpush1.bf16.msra.mxu0 %v345
    %377 = vmatprep.subr.bf16.mxu0 %v344
    %378 = vmatpush1.bf16.msra.mxu0 %v343
    %379 = vmatprep.subr.bf16.mxu0 %v342
    %380 = vmatpush1.bf16.msra.mxu0 %v341
    %381 = vmatprep.subr.bf16.mxu0 %v340
    %382 = vmatpush1.bf16.msra.mxu0 %v339
    %383 = vmatprep.subr.bf16.mxu0 %v338
    %384 = vmatpush1.bf16.msra.mxu0 %v337
    %385 = vmatprep.subr.bf16.mxu0 0
    %386 = vmatpush2.bf16.msra.mxu0 0
    %387 = vmatprep.subr.bf16.mxu0 0
    %388 = vmatpush2.bf16.msra.mxu0 0
    %389 = vmatprep.subr.bf16.mxu0 0
    %390 = vmatpush2.bf16.msra.mxu0 0
    %391 = vmatprep.subr.bf16.mxu0 0
    %392 = vmatpush2.bf16.msra.mxu0 0
    %393 = vmatprep.subr.bf16.mxu0 0
    %394 = vmatpush2.bf16.msra.mxu0 0
    %395 = vmatprep.subr.bf16.mxu0 0
    %396 = vmatpush2.bf16.msra.mxu0 0
    %397 = vmatprep.subr.bf16.mxu0 0
    %398 = vmatpush2.bf16.msra.mxu0 0
    %399 = vmatprep.subr.bf16.mxu0 0
    %400 = vmatpush2.bf16.msra.mxu0 0
    %401 = vmatprep.mubr.bf16.mxu0 0
    %402 = vmatmul.mubr.bf16.gmra.mxu0 %v148
    %v403 = vpop.f32.mrf.mxu0
    %v404 = vadd.f32 0.0, %v403
    %v405 = vpop.f32.mrf.mxu0
    %v406 = vadd.f32 0.0, %v405
    %v407 = vpop.f32.mrf.mxu0
    %v408 = vadd.f32 0.0, %v407
    %v409 = vpop.f32.mrf.mxu0
    %v410 = vadd.f32 0.0, %v409
    %411 = vdwg.mxu0
    %v412 = vmul.f32 %v404, %v404
    %v413 = vmul.f32 %v406, %v406
    %v414 = vmul.f32 %v408, %v408
    %v415 = vmul.f32 %v410, %v410
    %v416 = vmul.f32 %v412, 0.035677407
    %v417 = vmul.f32 %v413, 0.035677407
    %v418 = vmul.f32 %v414, 0.035677407
    %v419 = vmul.f32 %v415, 0.035677407
    %v420 = vadd.f32 %v416, 0.7978846
    %v421 = vadd.f32 %v417, 0.7978846
    %v422 = vadd.f32 %v418, 0.7978846
    %v423 = vadd.f32 %v419, 0.7978846
    %v424 = vmul.f32 %v404, %v420
    %v425 = vmul.f32 %v406, %v421
    %v426 = vmul.f32 %v408, %v422
    %v427 = vmul.f32 %v410, %v423
    %v428 = vtanh.pop %v424
    %v429 = vtanh.pop %v425
    %v430 = vtanh.pop %v426
    %v431 = vtanh.pop %v427
    %v432 = vmul.f32 %v265, 0.5
    %v433 = vmul.f32 %v267, 0.5
    %v434 = vmul.f32 %v269, 0.5
    %v435 = vmul.f32 %v271, 0.5
    %v436 = vadd.f32 %v428, 1.0
    %v437 = vadd.f32 %v429, 1.0
    %v438 = vadd.f32 %v430, 1.0
    %v439 = vadd.f32 %v431, 1.0
    %v440 = vmul.f32 %v404, %v436
    %v441 = vmul.f32 %v406, %v437
    %v442 = vmul.f32 %v408, %v438
    %v443 = vmul.f32 %v410, %v439
    %v444 = vmul.f32 %v432, %v440
    %v445 = vmul.f32 %v433, %v441
    %v446 = vmul.f32 %v434, %v442
    %v447 = vmul.f32 %v435, %v443
    %v448 = vld [vmem:[#allocation4] sm:$0xff]
    %v449 = vld [vmem:[#allocation4 + $0x8] sm:$0xff]
    %v450 = vadd.f32 %v444, %v445
    %451 = vadd.xlane.f32.xlu0 %v450
    %v452 = vpop.xlane.xlu0 %451
    %v453 = vadd.f32 %v446, %v447
    %454 = vadd.xlane.f32.xlu0 %v453
    %v455 = vpop.xlane.xlu0 %454
    %v456 = vadd.f32 %v448, %v452
    %v457 = vadd.f32 %v449, %v455
    %vm458 = vcmask 7168
    %459 = vst.msk [vmem:[#allocation4] sm:$0xff] %vm458, %v456
    %460 = vst.msk [vmem:[#allocation4 + $0x8] sm:$0xff] %vm458, %v457
    %v461 = vld [vmem:[#allocation5] sm:$0xff]
    %v462 = vld [vmem:[#allocation5 + $0x8] sm:$0xff]
    %v463 = vmul.f32 %v444, %v444
    %v464 = vmul.f32 %v445, %v445
    %v465 = vmul.f32 %v446, %v446
    %v466 = vmul.f32 %v447, %v447
    %v467 = vadd.f32 %v463, %v464
    %468 = vadd.xlane.f32.xlu0 %v467
    %v469 = vpop.xlane.xlu0 %468
    %v470 = vadd.f32 %v465, %v466
    %471 = vadd.xlane.f32.xlu0 %v470
    %v472 = vpop.xlane.xlu0 %471
    %v473 = vadd.f32 %v461, %v469
    %v474 = vadd.f32 %v462, %v472
    %475 = vst.msk [vmem:[#allocation5] sm:$0xff] %vm458, %v473
    %476 = vst.msk [vmem:[#allocation5 + $0x8] sm:$0xff] %vm458, %v474
    %v477 = vld [vmem:[#allocation13] sm:$0xf]
    %v478 = vld [vmem:[#allocation13 + $0x4] sm:$0xf]
    %v479 = vld [vmem:[#allocation13 + $0x8] sm:$0xf]
    %v480 = vld [vmem:[#allocation13 + $0xc] sm:$0xf]
    %v481 = vld [vmem:[#allocation13 + $0x10] sm:$0xf]
    %v482 = vld [vmem:[#allocation13 + $0x14] sm:$0xf]
    %v483 = vld [vmem:[#allocation13 + $0x18] sm:$0xf]
    %v484 = vld [vmem:[#allocation13 + $0x1c] sm:$0xf]
    %v485 = vld [vmem:[#allocation13 + $0x20] sm:$0xf]
    %v486 = vld [vmem:[#allocation13 + $0x24] sm:$0xf]
    %v487 = vld [vmem:[#allocation13 + $0x28] sm:$0xf]
    %v488 = vld [vmem:[#allocation13 + $0x2c] sm:$0xf]
    %v489 = vld [vmem:[#allocation13 + $0x30] sm:$0xf]
    %v490 = vld [vmem:[#allocation13 + $0x34] sm:$0xf]
    %v491 = vld [vmem:[#allocation13 + $0x38] sm:$0xf]
    %v492 = vld [vmem:[#allocation13 + $0x3c] sm:$0xf]
    %v493 = vld [vmem:[#allocation13 + $0x40] sm:$0xf]
    %v494 = vld [vmem:[#allocation13 + $0x44] sm:$0xf]
    %v495 = vld [vmem:[#allocation13 + $0x48] sm:$0xf]
    %v496 = vld [vmem:[#allocation13 + $0x4c] sm:$0xf]
    %v497 = vld [vmem:[#allocation13 + $0x50] sm:$0xf]
    %v498 = vld [vmem:[#allocation13 + $0x54] sm:$0xf]
    %v499 = vld [vmem:[#allocation13 + $0x58] sm:$0xf]
    %v500 = vld [vmem:[#allocation13 + $0x5c] sm:$0xf]
    %v501 = vld [vmem:[#allocation13 + $0x60] sm:$0xf]
    %v502 = vld [vmem:[#allocation13 + $0x64] sm:$0xf]
    %v503 = vld [vmem:[#allocation13 + $0x68] sm:$0xf]
    %v504 = vld [vmem:[#allocation13 + $0x6c] sm:$0xf]
    %v505 = vld [vmem:[#allocation13 + $0x70] sm:$0xf]
    %v506 = vld [vmem:[#allocation13 + $0x74] sm:$0xf]
    %v507 = vld [vmem:[#allocation13 + $0x78] sm:$0xf]
    %v508 = vld [vmem:[#allocation13 + $0x7c] sm:$0xf]
    %v509 = vld [vmem:[#allocation6] sm:$0x1]
    %v510 = vunpack.c.l.bf16 %v477
    %v511 = vunpack.c.l.bf16 %v478
    %v512 = vunpack.c.l.bf16 %v479
    %v513 = vunpack.c.l.bf16 %v480
    %v514 = vunpack.c.l.bf16 %v481
    %v515 = vunpack.c.l.bf16 %v482
    %v516 = vunpack.c.l.bf16 %v483
    %v517 = vunpack.c.l.bf16 %v484
    %v518 = vunpack.c.l.bf16 %v485
    %v519 = vunpack.c.l.bf16 %v486
    %v520 = vunpack.c.l.bf16 %v487
    %v521 = vunpack.c.l.bf16 %v488
    %v522 = vunpack.c.l.bf16 %v489
    %v523 = vunpack.c.l.bf16 %v490
    %v524 = vunpack.c.l.bf16 %v491
    %v525 = vunpack.c.l.bf16 %v492
    %v526 = vunpack.c.l.bf16 %v493
    %v527 = vunpack.c.l.bf16 %v494
    %v528 = vunpack.c.l.bf16 %v495
    %v529 = vunpack.c.l.bf16 %v496
    %v530 = vunpack.c.l.bf16 %v497
    %v531 = vunpack.c.l.bf16 %v498
    %v532 = vunpack.c.l.bf16 %v499
    %v533 = vunpack.c.l.bf16 %v500
    %v534 = vunpack.c.l.bf16 %v501
    %v535 = vunpack.c.l.bf16 %v502
    %v536 = vunpack.c.l.bf16 %v503
    %v537 = vunpack.c.l.bf16 %v504
    %v538 = vunpack.c.l.bf16 %v505
    %v539 = vunpack.c.l.bf16 %v506
    %v540 = vunpack.c.l.bf16 %v507
    %v541 = vunpack.c.l.bf16 %v508
    %v542 = vadd.f32 %v510, %v511
    %v543 = vadd.f32 %v542, %v512
    %v544 = vadd.f32 %v543, %v513
    %v545 = vadd.f32 %v544, %v514
    %v546 = vadd.f32 %v545, %v515
    %v547 = vadd.f32 %v546, %v516
    %v548 = vadd.f32 %v547, %v517
    %v549 = vadd.f32 %v548, %v518
    %v550 = vadd.f32 %v549, %v519
    %v551 = vadd.f32 %v550, %v520
    %v552 = vadd.f32 %v551, %v521
    %v553 = vadd.f32 %v552, %v522
    %v554 = vadd.f32 %v553, %v523
    %v555 = vadd.f32 %v554, %v524
    %v556 = vadd.f32 %v555, %v525
    %v557 = vadd.f32 %v556, %v526
    %v558 = vadd.f32 %v557, %v527
    %v559 = vadd.f32 %v558, %v528
    %v560 = vadd.f32 %v559, %v529
    %v561 = vadd.f32 %v560, %v530
    %v562 = vadd.f32 %v561, %v531
    %v563 = vadd.f32 %v562, %v532
    %v564 = vadd.f32 %v563, %v533
    %v565 = vadd.f32 %v564, %v534
    %v566 = vadd.f32 %v565, %v535
    %v567 = vadd.f32 %v566, %v536
    %v568 = vadd.f32 %v567, %v537
    %v569 = vadd.f32 %v568, %v538
    %v570 = vadd.f32 %v569, %v539
    %v571 = vadd.f32 %v570, %v540
    %v572 = vadd.f32 %v571, %v541
    %v573 = vrot.slane %v572, 4
    %v574 = vadd.f32 %v572, %v573
    %v575 = vrot.slane %v574, 2
    %v576 = vadd.f32 %v574, %v575
    %v577 = vrot.slane %v576, 1
    %v578 = vadd.f32 %v576, %v577
    %v579 = vadd.f32 %v509, %v578
    %580 = vst [vmem:[#allocation6] sm:$0x1] %v579
    %v581 = vld [vmem:[#allocation3] sm:$0xff]
    %v582 = vld [vmem:[#allocation3 + $0x8] sm:$0xff]
    %v583 = vpack.c.bf16 %v446, %v444
    %v584 = vpack.c.bf16 %v447, %v445
    %v617 = vunpack.c.l.b16 %v477
    %v618 = vunpack.c.l.b16 %v478
    %v619 = vunpack.c.l.b16 %v479
    %v620 = vunpack.c.l.b16 %v480
    %v621 = vunpack.c.l.b16 %v481
    %v622 = vunpack.c.l.b16 %v482
    %v623 = vunpack.c.l.b16 %v483
    %v624 = vunpack.c.l.b16 %v484
    %v625 = vunpack.c.l.b16 %v485
    %v626 = vunpack.c.l.b16 %v486
    %v627 = vunpack.c.l.b16 %v487
    %v628 = vunpack.c.l.b16 %v488
    %v629 = vunpack.c.l.b16 %v489
    %v630 = vunpack.c.l.b16 %v490
    %v631 = vunpack.c.l.b16 %v491
    %v632 = vunpack.c.l.b16 %v492
    %v633 = vunpack.c.l.b16 %v493
    %v634 = vunpack.c.l.b16 %v494
    %v635 = vunpack.c.l.b16 %v495
    %v636 = vunpack.c.l.b16 %v496
    %v637 = vunpack.c.l.b16 %v497
    %v638 = vunpack.c.l.b16 %v498
    %v639 = vunpack.c.l.b16 %v499
    %v640 = vunpack.c.l.b16 %v500
    %v641 = vunpack.c.l.b16 %v501
    %v642 = vunpack.c.l.b16 %v502
    %v643 = vunpack.c.l.b16 %v503
    %v644 = vunpack.c.l.b16 %v504
    %v645 = vunpack.c.l.b16 %v505
    %v646 = vunpack.c.l.b16 %v506
    %v647 = vunpack.c.l.b16 %v507
    %v648 = vunpack.c.l.b16 %v508
    %v649 = vpack.c.b16 %v618, %v617
    %v650 = vpack.c.b16 %v620, %v619
    %v651 = vpack.c.b16 %v622, %v621
    %v652 = vpack.c.b16 %v624, %v623
    %v653 = vpack.c.b16 %v626, %v625
    %v654 = vpack.c.b16 %v628, %v627
    %v655 = vpack.c.b16 %v630, %v629
    %v656 = vpack.c.b16 %v632, %v631
    %v657 = vpack.c.b16 %v634, %v633
    %v658 = vpack.c.b16 %v636, %v635
    %v659 = vpack.c.b16 %v638, %v637
    %v660 = vpack.c.b16 %v640, %v639
    %v661 = vpack.c.b16 %v642, %v641
    %v662 = vpack.c.b16 %v644, %v643
    %v663 = vpack.c.b16 %v646, %v645
    %v664 = vpack.c.b16 %v648, %v647
    %681 = vmatprep.subr.bf16.mxu0 0
    %682 = vmatpush1.bf16.msra.mxu0 %v656
    %683 = vmatprep.subr.bf16.mxu0 0
    %684 = vmatpush1.bf16.msra.mxu0 %v655
    %685 = vmatprep.subr.bf16.mxu0 0
    %686 = vmatpush1.bf16.msra.mxu0 %v654
    %687 = vmatprep.subr.bf16.mxu0 0
    %688 = vmatpush1.bf16.msra.mxu0 %v653
    %689 = vmatprep.subr.bf16.mxu0 0
    %690 = vmatpush1.bf16.msra.mxu0 %v652
    %691 = vmatprep.subr.bf16.mxu0 0
    %692 = vmatpush1.bf16.msra.mxu0 %v651
    %693 = vmatprep.subr.bf16.mxu0 0
    %694 = vmatpush1.bf16.msra.mxu0 %v650
    %695 = vmatprep.subr.bf16.mxu0 0
    %696 = vmatpush1.bf16.msra.mxu0 %v649
    %697 = vmatprep.subr.bf16.mxu0 0
    %698 = vmatpush2.bf16.msra.mxu0 %v664
    %699 = vmatprep.subr.bf16.mxu0 0
    %700 = vmatpush2.bf16.msra.mxu0 %v663
    %701 = vmatprep.subr.bf16.mxu0 0
    %702 = vmatpush2.bf16.msra.mxu0 %v662
    %703 = vmatprep.subr.bf16.mxu0 0
    %704 = vmatpush2.bf16.msra.mxu0 %v661
    %705 = vmatprep.subr.bf16.mxu0 0
    %706 = vmatpush2.bf16.msra.mxu0 %v660
    %707 = vmatprep.subr.bf16.mxu0 0
    %708 = vmatpush2.bf16.msra.mxu0 %v659
    %709 = vmatprep.subr.bf16.mxu0 0
    %710 = vmatpush2.bf16.msra.mxu0 %v658
    %711 = vmatprep.subr.bf16.mxu0 0
    %712 = vmatpush2.bf16.msra.mxu0 %v657
    %713 = vmatprep.mubr.bf16.mxu0 %v584
    %714 = vmatmul.mubr.bf16.gmra.mxu0 %v583
    %v715 = vpop.f32.mrf.mxu0
    %v716 = vadd.f32 0.0, %v715
    %v717 = vpop.f32.mrf.mxu0
    %v718 = vpop.f32.mrf.mxu0
    %v719 = vadd.f32 0.0, %v718
    %v720 = vpop.f32.mrf.mxu0
    %721 = vdwg.mxu0
    %v722 = vadd.f32 %v581, %v716
    %v723 = vadd.f32 %v582, %v719
    %724 = vst [vmem:[#allocation3] sm:$0xff] %v722
    %725 = vst [vmem:[#allocation3 + $0x8] sm:$0xff] %v723
    // Predicated region
    $region38: #{forward.1} parent=1 // pred_check
      %p726 = pneg %p74
    $region39: #{forward.1} parent=1 // pred_check_branch
      %728 = sbr.rel (%p726) target = $region41
    $region40: #{forward.1} parent=1 // pred_region
      %v729 = vld [vmem:[#allocation4] sm:$0xff]
      %v730 = vld [vmem:[#allocation4 + $0x8] sm:$0xff]
      %v731 = vmul.f32 %v729, 0.00390625
      %v732 = vmul.f32 %v730, 0.00390625
      %v733 = vld [vmem:[#allocation5] sm:$0xff]
      %v734 = vld [vmem:[#allocation5 + $0x8] sm:$0xff]
      %v735 = vmul.f32 %v733, 0.00390625
      %v736 = vmul.f32 %v734, 0.00390625
      %v737 = vmul.f32 %v731, %v731
      %v738 = vmul.f32 %v732, %v732
      %v739 = vsub.f32 %v735, %v737
      %v740 = vsub.f32 %v736, %v738
      %v741 = vmax.f32 %v739, 0.0
      %v742 = vmax.f32 %v740, 0.0
      %v743 = vadd.f32 %v741, 1e-12
      %v744 = vadd.f32 %v742, 1e-12
      %v745 = vrsqrt.pop %v743
      %v746 = vrsqrt.pop %v744
      %v747 = vld [vmem:[#allocation3] sm:$0xff]
      %v748 = vld [vmem:[#allocation3 + $0x8] sm:$0xff]
      %v749 = vld [vmem:[#allocation6] sm:$0x1]
      %751 = vset.pattern.permute.xlu0 0
      %752 = vperm.xlu0 %751, %v731
      %v753 = vpop.permute.xlu0 %752
      %756 = vset.pattern.permute.xlu0 0
      %757 = vperm.xlu0 %756, %v732
      %v758 = vpop.permute.xlu0 %757
      %v761 = vlaneseq
      %v762 = vshrl.u32 %v761, 7
      %v763 = vsub.s32 0, %v762
      %v764 = vrot.slane %v749, %v763
      %v766 = vmul.f32 %v753, %v764
      %v767 = vmul.f32 %v758, %v764
      %v768 = vsub.f32 %v747, %v766
      %v769 = vsub.f32 %v748, %v767
      %771 = vset.pattern.permute.xlu0 0
      %772 = vperm.xlu0 %771, %v745
      %v773 = vpop.permute.xlu0 %772
      %776 = vset.pattern.permute.xlu0 0
      %777 = vperm.xlu0 %776, %v746
      %v778 = vpop.permute.xlu0 %777
      %v780 = vmul.f32 %v768, %v773
      %v781 = vmul.f32 %v769, %v778
      %782 = vst [vmem:[#allocation15] sm:$0xff] %v780
      %783 = vst [vmem:[#allocation15 + $0x8] sm:$0xff] %v781
    $region41: #{forward.1} parent=1 // pred_fallthru
      _
    // Predicated region
    $region42: #{forward.1} parent=1 // pred_check
      _
    $region43: #{forward.1} parent=1 // pred_check_branch
      %785 = sbr.rel (0) target = $region45
    $region44: #{forward.1} parent=1 // pred_region
      %s787 = ssub.s32 256, 256
      %788 = vsyncadd [#allocation9], %s787
      %s789 = sshll.u32 [#allocation15], 4
      %s790 = int_to_ptr.vmem [resolvable:$true] %s789
      %795 = dma.vmem_to_hbm [thread:$0]  %s790, 256, %s4, [#allocation9], 128, 128, 8
    $region45: #{forward.1} parent=1 // pred_fallthru
      _
    // Predicated region
    $region46: #{forward.1} parent=1 // pred_check
      _
    $region47: #{forward.1} parent=1 // pred_check_branch
      %797 = sbr.rel (0) target = $region49
    $region48: #{forward.1} parent=1 // pred_region
      %798 = dma.done [#allocation9], 256
    $region49: #{forward.1} parent=1 // pred_fallthru
      _
    %799 = vsyncpa [#allocation8], 1
    %800 = vsyncpa [#allocation11], 1
    %801 = vsyncpa [#allocation14], 1
    %802 = vsyncpa [#allocation9], 1

</llo_original>
